<compile_context>
chip_gen: v7x
topology: tpu7x:2x2x1
jax: 0.10.0
libtpu: 0.0.40
codegen_flags: <defaults>
</compile_context>

<pallas_src>
import functools

import jax
import jax.numpy as jnp
from jax.experimental import pallas as pl
from jax.experimental.pallas import tpu as pltpu

_HEADROOM_BYTES = 8 * 1024 * 1024  # slack for compiler-internal scratch


def _vmem_and_block_budget():
    """(vmem_limit_bytes, per-io-block target bytes), generation-aware."""
    vmem_bytes = 128 * 1024 * 1024
    try:
        vmem_bytes = int(pltpu.get_tpu_info().vmem_capacity_bytes)
    except Exception:
        pass
    if vmem_bytes >= 128 * 1024 * 1024:      # v5e / v6e (128 MiB VMEM)
        return 64 * 1024 * 1024, 8 * 1024 * 1024
    else:                                    # v7x (64 MiB VMEM per TC)
        return 48 * 1024 * 1024, 6 * 1024 * 1024


def _sublane_tile(dtype):
    itemsize = jnp.dtype(dtype).itemsize
    return max(8, 32 // itemsize)            # 8 f32, 16 bf16, 32 int8


# ---------------------------------------------------------------------------
# Kernels
# ---------------------------------------------------------------------------

def _normalize_chw_kernel(x_ref, o_ref, *, power):
    # Tile: (tb, C, t_hw).  Reduce over the channel (sublane) axis=1.
    x = x_ref[...]
    xf = x.astype(jnp.float32)
    if power == 2:
        sumsq = jnp.sum(xf * xf, axis=1, keepdims=True)
        inv = jax.lax.rsqrt(sumsq).astype(x.dtype)   # broadcast mul in input dtype
        o_ref[...] = x * inv
    else:
        # TODO(synk): matches the naive reference formula (x**p, not |x|**p);
        # negative channel sums give NaN exactly like the PyTorch module would.
        s = jnp.sum(xf ** power, axis=1, keepdims=True)
        norm = jnp.exp(jnp.log(s) * (1.0 / power))   # EUP exp/log
        o_ref[...] = (xf * pl.reciprocal(norm)).astype(o_ref.dtype)


def _normalize_rows_kernel(x_ref, o_ref, *, power):
    # Tile: (tm, C).  Reduce over the last (channel / lane) axis.
    x = x_ref[...]
    xf = x.astype(jnp.float32)
    if power == 2:
        sumsq = jnp.sum(xf * xf, axis=-1, keepdims=True)
        inv = jax.lax.rsqrt(sumsq).astype(x.dtype)
        o_ref[...] = x * inv
    else:
        s = jnp.sum(xf ** power, axis=-1, keepdims=True)
        norm = jnp.exp(jnp.log(s) * (1.0 / power))
        o_ref[...] = (xf * pl.reciprocal(norm)).astype(o_ref.dtype)


# ---------------------------------------------------------------------------
# Tile sizing (sublane-padding and f32-temp aware)
# ---------------------------------------------------------------------------

def _choose_tile_3d(B, C, HW, dtype, vmem_limit, target_io_bytes):
    """Pick (tb, t_hw) for (tb, C, t_hw) blocks of a (B, C, HW) array."""
    itemsize = jnp.dtype(dtype).itemsize
    c_pad = pl.cdiv(C, _sublane_tile(dtype)) * _sublane_tile(dtype)
    c_pad32 = pl.cdiv(C, 8) * 8
    # Per unit of (tb * t_hw):
    io_per_u = c_pad * itemsize                       # one (in or out) buffer
    temp_per_u = c_pad32 * 4 if itemsize < 4 else 0   # in-kernel f32 upcast
    per_u = 4 * io_per_u + temp_per_u                 # 2x in + 2x out + temp
    budget = max(per_u * 128, vmem_limit - _HEADROOM_BYTES)
    u_max = budget // per_u
    u_max = min(u_max, max(128, target_io_bytes // io_per_u))

    if HW <= u_max:
        # Small feature map: take the full spatial extent and fold batch in.
        t_hw = HW
        tb = max(1, min(B, u_max // HW))
    else:
        tb = 1
        t_hw = min(HW, max(128, (u_max // 128) * 128))  # lane-dense multiple of 128
    return tb, t_hw


def _choose_tile_2d(N, C, dtype, vmem_limit, target_io_bytes):
    itemsize = jnp.dtype(dtype).itemsize
    sub = _sublane_tile(dtype)
    c_lane = pl.cdiv(C, 128) * 128
    row_io = c_lane * itemsize
    row_temp = c_lane * 4 if itemsize < 4 else 0
    per_row = 4 * row_io + row_temp
    budget = max(per_row * sub, vmem_limit - _HEADROOM_BYTES)
    tm_max = budget // per_row
    tm_max = min(tm_max, max(sub, target_io_bytes // row_io))
    if tm_max >= N:
        return N
    return max(sub, (tm_max // sub) * sub)


# ---------------------------------------------------------------------------
# Wrappers
# ---------------------------------------------------------------------------

def _normalize_nchw(x, power):
    """L_p-normalize over dim=1 for rank>=3 inputs (B, C, spatial...)."""
    shape = x.shape
    B, C = shape[0], shape[1]
    HW = 1
    for d in shape[2:]:
        HW *= d
    x3 = x.reshape(B, C, HW)                       # free reshape, no transpose

    vmem_limit, target_io = _vmem_and_block_budget()
    tb, t_hw = _choose_tile_3d(B, C, HW, x.dtype, vmem_limit, target_io)
    grid = (pl.cdiv(B, tb), pl.cdiv(HW, t_hw))

    y3 = pl.pallas_call(
        functools.partial(_normalize_chw_kernel, power=power),
        out_shape=jax.ShapeDtypeStruct((B, C, HW), x.dtype),
        grid_spec=pltpu.PrefetchScalarGridSpec(
            num_scalar_prefetch=0,
            grid=grid,
            in_specs=[pl.BlockSpec((tb, C, t_hw), lambda b, t: (b, 0, t))],
            out_specs=pl.BlockSpec((tb, C, t_hw), lambda b, t: (b, 0, t)),
        ),
        compiler_params=pltpu.CompilerParams(
            dimension_semantics=("parallel", "parallel"),
            vmem_limit_bytes=vmem_limit,
        ),
    )(x3)
    return y3.reshape(shape)


def _normalize_2d(x2d, power):
    """L_p-normalize each row of a (N, C) array."""
    N, C = x2d.shape
    vmem_limit, target_io = _vmem_and_block_budget()
    tm = _choose_tile_2d(N, C, x2d.dtype, vmem_limit, target_io)
    grid = (pl.cdiv(N, tm),)

    # Note: when C is not a multiple of 128 stores are masked; for image-style
    # inputs prefer the rank>=3 path which keeps the long axis lane-dense.
    return pl.pallas_call(
        functools.partial(_normalize_rows_kernel, power=power),
        out_shape=jax.ShapeDtypeStruct((N, C), x2d.dtype),
        grid_spec=pltpu.PrefetchScalarGridSpec(
            num_scalar_prefetch=0,
            grid=grid,
            in_specs=[pl.BlockSpec((tm, C), lambda i: (i, 0))],
            out_specs=pl.BlockSpec((tm, C), lambda i: (i, 0)),
        ),
        compiler_params=pltpu.CompilerParams(
            dimension_semantics=("parallel",),
            vmem_limit_bytes=vmem_limit,
        ),
    )(x2d)


def normalize(x, power=2):
    """Equivalent of Normalize(power).forward(x)."""
    if x.ndim == 2:
        return _normalize_2d(x, power)
    elif x.ndim >= 3:
        return _normalize_nchw(x, power)
    else:
        raise ValueError(f"unsupported rank {x.ndim}")


if __name__ == "__main__":
    key = jax.random.PRNGKey(0)
    k1, k2 = jax.random.split(key)

    # 4-D NCHW case (the module's typical input).
    x = jax.random.normal(k1, (2, 4, 16, 16), dtype=jnp.float32)
    out = jax.block_until_ready(normalize(x, power=2))
    norm_ref = jnp.sum(x ** 2, axis=1, keepdims=True) ** 0.5
    ref = x / norm_ref
    assert out.shape == x.shape and out.dtype == x.dtype
    assert jnp.max(jnp.abs(out - ref)) < 1e-5

    # 2-D (N, C) embedding-style case.
    x2 = jax.random.normal(k2, (8, 32), dtype=jnp.float32)
    out2 = jax.block_until_ready(normalize(x2, power=2))
    ref2 = x2 / (jnp.sum(x2 ** 2, axis=1, keepdims=True) ** 0.5)
    assert jnp.max(jnp.abs(out2 - ref2)) < 1e-5

    print("KERNEL_OK")
</pallas_src>

<mosaic_0001>
module attributes {stable_mosaic.version = 11 : i64} {
  func.func @_normalize_chw_kernel(%arg0: i32, %arg1: i32, %arg2: memref<2x4x256xf32, #tpu.memory_space<vmem>>, %arg3: memref<2x4x256xf32, #tpu.memory_space<vmem>>) attributes {dimension_semantics = [#tpu.dimension_semantics<parallel>, #tpu.dimension_semantics<parallel>], iteration_bounds = array<i64: 1, 1>, scalar_prefetch = 0 : i64, scratch_operands = 0 : i64, tpu.core_type = #tpu.core_type<tc>, window_params = [{transform_indices = @transform_0, window_bounds = array<i64: 2, 4, 256>}, {transform_indices = @transform_1, window_bounds = array<i64: 2, 4, 256>}]} {
    %c0 = arith.constant 0 : index
    %c0_0 = arith.constant 0 : index
    %c0_1 = arith.constant 0 : index
    %0 = vector.load %arg2[%c0, %c0_0, %c0_1] : memref<2x4x256xf32, #tpu.memory_space<vmem>>, vector<2x4x256xf32>
    %1 = arith.mulf %0, %0 : vector<2x4x256xf32>
    %cst = arith.constant dense<0.000000e+00> : vector<2x256xf32>
    %2 = vector.multi_reduction <add>, %1, %cst [1] : vector<2x4x256xf32> to vector<2x256xf32>
    %3 = vector.shape_cast %2 : vector<2x256xf32> to vector<2x1x256xf32>
    %4 = math.rsqrt %3 : vector<2x1x256xf32>
    %5 = vector.broadcast %4 : vector<2x1x256xf32> to vector<2x4x256xf32>
    %6 = arith.mulf %0, %5 : vector<2x4x256xf32>
    %c0_2 = arith.constant 0 : index
    %c0_3 = arith.constant 0 : index
    %c0_4 = arith.constant 0 : index
    %7 = vector.load %arg3[%c0_2, %c0_3, %c0_4] : memref<2x4x256xf32, #tpu.memory_space<vmem>>, vector<2x4x256xf32>
    tpu.vector_store %arg3[%c0_2, %c0_3, %c0_4], %6 {strides = array<i32>} : memref<2x4x256xf32, #tpu.memory_space<vmem>>, vector<2x4x256xf32>,
    return
  }
  func.func @transform_0(%arg0: i32, %arg1: i32) -> (i32, i32, i32) {
    %c0_i32 = arith.constant 0 : i32
    %c0_i32_0 = arith.constant 0 : i32
    return %arg0, %c0_i32, %arg1 : i32, i32, i32
  }
  func.func @transform_1(%arg0: i32, %arg1: i32) -> (i32, i32, i32) {
    %c0_i32 = arith.constant 0 : i32
    %c0_i32_0 = arith.constant 0 : i32
    return %arg0, %c0_i32, %arg1 : i32, i32, i32
  }
}

</mosaic_0001>

<llo_original>
// kernel: tpu_custom_call.1
$region0: #{tpu_custom_call.1}
  #allocation0 [shape = 'u32[]', space=smem, size = 0x4, offset = 0x4, fixed_abs, tag = 'smem constant byte address 0x4 - core index']
  #allocation1 [shape = 'u32[144,128]{1,0:T(1,128)}', space=vmem, size = 0x12000, scoped, tag = 'internal scratch']
  %s0 = inlined_call_operand.hbm [shape: f32[2,4,256], index: 0, kind: input, shape index: {}]
  %s1 = inlined_call_operand.hbm [shape: f32[2,4,256], index: 1, kind: output, shape index: {}]
  %s2 = sld [smem:[#allocation0]]
  $region18: #{tpu_custom_call.1} parent=0
    _
  %s4 = ssub.s32 1, %s2
  %s5 = scalar_select 0, %s4, %s2
  $region1: #{tpu_custom_call.1} parent=0
    #allocation2 [shape = 'u8[8192]{0}', space=vmem, size = 0x2000, scoped, tag = 'input window, operand 0, single buffered']
    #allocation3 [shape = 's32[1]{0}', space=sflag, size = 0x4, scoped, tag = 'scoped memory for tpu_custom_call.1']
    #allocation4 [shape = 's32[1]{0}', space=sflag, size = 0x4, scoped, tag = 'scoped memory for tpu_custom_call.1']
    #allocation5 [shape = 'u8[8192]{0}', space=vmem, size = 0x2000, scoped, tag = 'output window, operand 0, single buffered']
    %6 = vsyncpa [#allocation3], 0
    %7 = vsyncpa [#allocation4], 0
    // Predicated region
    $region2: #{tpu_custom_call.1} parent=1 // pred_check
      _
    $region3: #{tpu_custom_call.1} parent=1 // pred_check_branch
      %9 = sbr.rel (0) target = $region5
    $region4: #{tpu_custom_call.1} parent=1 // pred_region
      %s11 = ssub.s32 256, 256
      %12 = vsyncadd [#allocation3], %s11
      %s13 = sshll.u32 [#allocation2], 4
      %s14 = int_to_ptr.vmem [resolvable:$true] %s13
      %19 = dma.hbm_to_vmem [thread:$0]  %s0, 256, %s14, [#allocation3], 128, 128, 8
    $region5: #{tpu_custom_call.1} parent=1 // pred_fallthru
      _
    // Predicated region
    $region6: #{tpu_custom_call.1} parent=1 // pred_check
      _
    $region7: #{tpu_custom_call.1} parent=1 // pred_check_branch
      %21 = sbr.rel (0) target = $region9
    $region8: #{tpu_custom_call.1} parent=1 // pred_region
      %22 = dma.done [#allocation3], 256
    $region9: #{tpu_custom_call.1} parent=1 // pred_fallthru
      _
    %v23 = vld [vmem:[#allocation2] sm:$0xff]
    %v24 = vld [vmem:[#allocation2 + $0x8] sm:$0xff]
    %v25 = vmul.f32 %v23, %v23
    %v26 = vmul.f32 %v24, %v24
    %v29 = vcombine.high %v25, %v25
    %v30 = vcombine.high %v26, %v26
    %vm33 = vcmask 1043456
    %v34 = vsel %vm33, %v25, 0.0
    %v35 = vrot.slane %v34, 4
    %v36 = vadd.f32 %v34, %v35
    %v37 = vrot.slane %v36, 2
    %v38 = vadd.f32 %v36, %v37
    %v39 = vrot.slane %v38, 1
    %v40 = vadd.f32 %v38, %v39
    %v41 = vsel %vm33, %v29, 0.0
    %v42 = vrot.slane %v41, 4
    %v43 = vadd.f32 %v41, %v42
    %v44 = vrot.slane %v43, 2
    %v45 = vadd.f32 %v43, %v44
    %v46 = vrot.slane %v45, 1
    %v47 = vadd.f32 %v45, %v46
    %v48 = vsel %vm33, %v26, 0.0
    %v49 = vrot.slane %v48, 4
    %v50 = vadd.f32 %v48, %v49
    %v51 = vrot.slane %v50, 2
    %v52 = vadd.f32 %v50, %v51
    %v53 = vrot.slane %v52, 1
    %v54 = vadd.f32 %v52, %v53
    %v55 = vsel %vm33, %v30, 0.0
    %v56 = vrot.slane %v55, 4
    %v57 = vadd.f32 %v55, %v56
    %v58 = vrot.slane %v57, 2
    %v59 = vadd.f32 %v57, %v58
    %v60 = vrot.slane %v59, 1
    %v61 = vadd.f32 %v59, %v60
    %v62 = vrsqrt.pop %v40
    %v63 = vrsqrt.pop %v47
    %v64 = vrsqrt.pop %v54
    %v65 = vrsqrt.pop %v61
    %v70 = vcombine.low %v62, %v63
    %v71 = vcombine.low %v64, %v65
    %v74 = vmul.f32 %v23, %v70
    %v75 = vmul.f32 %v24, %v71
    %76 = vst [vmem:[#allocation5] sm:$0xff] %v74
    %77 = vst [vmem:[#allocation5 + $0x8] sm:$0xff] %v75
    // Predicated region
    $region10: #{tpu_custom_call.1} parent=1 // pred_check
      _
    $region11: #{tpu_custom_call.1} parent=1 // pred_check_branch
      %79 = sbr.rel (0) target = $region13
    $region12: #{tpu_custom_call.1} parent=1 // pred_region
      %s81 = ssub.s32 256, 256
      %82 = vsyncadd [#allocation4], %s81
      %s83 = sshll.u32 [#allocation5], 4
      %s84 = int_to_ptr.vmem [resolvable:$true] %s83
      %89 = dma.vmem_to_hbm [thread:$0]  %s84, 256, %s1, [#allocation4], 128, 128, 8
    $region13: #{tpu_custom_call.1} parent=1 // pred_fallthru
      _
    // Predicated region
    $region14: #{tpu_custom_call.1} parent=1 // pred_check
      _
    $region15: #{tpu_custom_call.1} parent=1 // pred_check_branch
      %91 = sbr.rel (0) target = $region17
    $region16: #{tpu_custom_call.1} parent=1 // pred_region
      %92 = dma.done [#allocation4], 256
    $region17: #{tpu_custom_call.1} parent=1 // pred_fallthru
      _
    %93 = vsyncpa [#allocation3], 1
    %94 = vsyncpa [#allocation4], 1

</llo_original>
